<compile_context>
chip_gen: v5e
topology: v5e:2x2
jax: 0.10.0
libtpu: 0.0.40
codegen_flags: <defaults>
</compile_context>

<pallas_src>
import functools

import jax
import jax.numpy as jnp
from jax import lax
from jax.experimental import pallas as pl
from jax.experimental.pallas import tpu as pltpu

# ---- static config: Bottleneck(inplanes=16, planes=4, stride=1, dilation=1, downsample=None)
INPLANES = 16
PLANES = 4
EXPANSION = 4
OUTPLANES = PLANES * EXPANSION        # == INPLANES so the identity residual is valid
STRIDE = 1                            # stride must be 1 when downsample is None
DILATION = 1
BN_EPS = 1e-5


def bottleneck_kernel(x_ref, w1_ref, b1_ref, w2_ref, b2_ref, w3_ref, b3_ref,
                      o_ref, *, img_h):
    """Row-flattened, lane-dense activation layout.

    x_ref : (M, W*Cin)  f32    M = (#images in block) * H, lane = w*Cin + c
    w1_ref: (W*Cin, W*P) bf16  conv1 1x1 block-diagonal (BN scale folded)
    w2_ref: (3*W*P, W*P) bf16  conv2 3x3: [kh=0 | kh=1 | kh=2] bands stacked on K
    w3_ref: (W*P, W*4P)  bf16  conv3 1x1 block-diagonal
    b*_ref: (1, W*C)     f32   folded BN bias rows
    o_ref : (M, W*4P)    f32
    """
    x = x_ref[...]                                           # (M, W*Cin) f32
    m_rows = x.shape[0]

    # ---- conv1 (1x1) + bn1 + relu : one bf16 MXU matmul, f32 accumulate ----
    h1 = jnp.maximum(
        jnp.dot(x.astype(jnp.bfloat16), w1_ref[...],
                preferred_element_type=jnp.float32) + b1_ref[...], 0.0)

    # ---- conv2 (3x3, padding=1) + bn2 + relu ----
    # Height taps via XLU roll + per-image edge masks (row % H so images packed
    # along the row axis never bleed into each other); width taps and zero
    # padding along W are folded into the banded weights.  The three kh bands
    # are fused into ONE matmul by concatenating along K.
    row = lax.broadcasted_iota(jnp.int32, h1.shape, 0) % img_h
    up = jnp.where(row >= 1,
                   pltpu.roll(h1, shift=1, axis=0), 0.0)          # h1[r-1]
    down = jnp.where(row <= img_h - 2,
                     pltpu.roll(h1, shift=m_rows - 1, axis=0), 0.0)  # h1[r+1]

    lhs2 = jnp.concatenate([up, h1, down], axis=1).astype(jnp.bfloat16)  # (M, 3*W*P)
    h2 = jnp.maximum(
        jnp.dot(lhs2, w2_ref[...],
                preferred_element_type=jnp.float32) + b2_ref[...], 0.0)  # (M, W*P)

    # ---- conv3 (1x1) + bn3 : one bf16 MXU matmul ----
    h3 = jnp.dot(h2.astype(jnp.bfloat16), w3_ref[...],
                 preferred_element_type=jnp.float32) + b3_ref[...]       # (M, W*4P)

    # ---- residual add + relu (f32, same (row, W*C) flattening as the input) ----
    o_ref[...] = jnp.maximum(h3 + x, 0.0)


def bottleneck_forward(x_nchw, params, *, row_blocks=1):
    """x_nchw: (N, C, H, W) float32 -> (N, 4*planes, H, W) float32.

    row_blocks: number of grid steps along the row axis.  Default 1 (whole
    batch in one block -> biggest M, single set of weight DMAs).  Set to 2 on
    v7x to shard whole-image blocks across its two TensorCores; N must be
    divisible by row_blocks so every block holds complete images.
    """
    w1bd, b1r, w2cat, b2r, w3bd, b3r = params
    N, C, H, W = x_nchw.shape
    assert C == INPLANES, "input channels must match inplanes"
    assert INPLANES == OUTPLANES and STRIDE == 1, \
        "downsample=None requires inplanes == planes*4 and stride == 1"
    assert N % row_blocks == 0, "each row block must hold whole images"

    # NCHW -> lane-dense (N*H, W*C); transpose + flatten fuse into one XLA copy.
    x = jnp.transpose(x_nchw, (0, 2, 3, 1)).reshape(N * H, W * C)
    bm = (N // row_blocks) * H                     # rows per grid step

    kernel = functools.partial(bottleneck_kernel, img_h=H)

    out = pl.pallas_call(
        kernel,
        out_shape=jax.ShapeDtypeStruct((N * H, W * OUTPLANES), jnp.float32),
        grid_spec=pltpu.PrefetchScalarGridSpec(
            num_scalar_prefetch=0,
            grid=(row_blocks,),
            in_specs=[
                pl.BlockSpec((bm, W * C), lambda i: (i, 0)),
                pl.BlockSpec(w1bd.shape, lambda i: (0, 0)),
                pl.BlockSpec(b1r.shape, lambda i: (0, 0)),
                pl.BlockSpec(w2cat.shape, lambda i: (0, 0)),
                pl.BlockSpec(b2r.shape, lambda i: (0, 0)),
                pl.BlockSpec(w3bd.shape, lambda i: (0, 0)),
                pl.BlockSpec(b3r.shape, lambda i: (0, 0)),
            ],
            out_specs=pl.BlockSpec((bm, W * OUTPLANES), lambda i: (i, 0)),
        ),
        compiler_params=pltpu.CompilerParams(
            dimension_semantics=("parallel",)),
    )(x, w1bd, b1r, w2cat, b2r, w3bd, b3r)

    return jnp.transpose(out.reshape(N, H, W, OUTPLANES), (0, 3, 1, 2))


def make_params(key, W):
    """Deterministic synthetic parameters in PyTorch layouts, then convert to
    the kernel's block-diagonal / banded layouts.  BN scale is folded into the
    (bf16) matmul weights; BN bias stays as an f32 row."""
    ks = jax.random.split(key, 6)
    conv1_w = 0.1 * jax.random.normal(ks[0], (PLANES, INPLANES, 1, 1), jnp.float32)
    conv2_w = 0.1 * jax.random.normal(ks[1], (PLANES, PLANES, 3, 3), jnp.float32)
    conv3_w = 0.1 * jax.random.normal(ks[2], (OUTPLANES, PLANES, 1, 1), jnp.float32)

    def bn_params(k, c):
        kg, kb, km, kv = jax.random.split(k, 4)
        gamma = 1.0 + 0.1 * jax.random.normal(kg, (c,), jnp.float32)
        beta = 0.1 * jax.random.normal(kb, (c,), jnp.float32)
        mean = 0.1 * jax.random.normal(km, (c,), jnp.float32)
        var = 1.0 + 0.5 * jax.random.uniform(kv, (c,), jnp.float32)
        return gamma, beta, mean, var

    bn1 = bn_params(ks[3], PLANES)
    bn2 = bn_params(ks[4], PLANES)
    bn3 = bn_params(ks[5], OUTPLANES)

    def fold(bn):
        g, b, m, v = bn
        scale = g / jnp.sqrt(v + BN_EPS)
        return scale, b - m * scale

    s1, c1 = fold(bn1)
    s2, c2 = fold(bn2)
    s3, c3 = fold(bn3)

    # conv+BN fusion: per-output-channel BN scale folded into the conv weights (f32 build).
    w1f = conv1_w[:, :, 0, 0].T * s1[None, :]                             # (Cin, P)
    w2f = jnp.transpose(conv2_w, (2, 3, 1, 0)) * s2[None, None, None, :]  # (kh,kw,Cin,P)
    w3f = conv3_w[:, :, 0, 0].T * s3[None, :]                             # (P, 4P)

    eye_w = jnp.eye(W, dtype=jnp.float32)
    w1bd = jnp.kron(eye_w, w1f)                    # (W*Cin, W*P) block-diagonal
    w3bd = jnp.kron(eye_w, w3f)                    # (W*P, W*4P)  block-diagonal

    def band(kh):
        # Block-tridiagonal band: folds the 3 kw taps and the zero padding
        # along W into a single (W*P, W*P) matrix for height offset kh-1.
        return sum(jnp.kron(jnp.eye(W, k=-(kw - 1), dtype=jnp.float32), w2f[kh, kw])
                   for kw in range(3))

    # Stack the three kh bands along K so conv2 is a single matmul against
    # the [up | center | down] K-concatenated LHS.
    w2cat = jnp.concatenate([band(0), band(1), band(2)], axis=0)   # (3*W*P, W*P)

    # bf16 matmul operands (f32 accumulation in-kernel).
    w1bd = w1bd.astype(jnp.bfloat16)
    w2cat = w2cat.astype(jnp.bfloat16)
    w3bd = w3bd.astype(jnp.bfloat16)

    b1r = jnp.tile(c1, W)[None, :]                 # (1, W*P)   f32
    b2r = jnp.tile(c2, W)[None, :]                 # (1, W*P)   f32
    b3r = jnp.tile(c3, W)[None, :]                 # (1, W*4P)  f32

    kernel_params = (w1bd, b1r, w2cat, b2r, w3bd, b3r)
    torch_layout = (conv1_w, conv2_w, conv3_w, bn1, bn2, bn3)
    return kernel_params, torch_layout


def reference_forward(x, torch_layout):
    """Pure-JAX (XLA, f32) reference matching PyTorch Bottleneck.forward in eval mode."""
    conv1_w, conv2_w, conv3_w, bn1, bn2, bn3 = torch_layout

    def conv(x, w, padding=0, dilation=1):
        return lax.conv_general_dilated(
            x, w, window_strides=(STRIDE, STRIDE),
            padding=[(padding, padding), (padding, padding)],
            rhs_dilation=(dilation, dilation),
            dimension_numbers=("NCHW", "OIHW", "NCHW"))

    def bn(x, p):
        g, b, m, v = p
        sh = (1, -1, 1, 1)
        return (x - m.reshape(sh)) / jnp.sqrt(v.reshape(sh) + BN_EPS) * g.reshape(sh) + b.reshape(sh)

    residual = x
    out = jnp.maximum(bn(conv(x, conv1_w), bn1), 0.0)
    out = jnp.maximum(bn(conv(out, conv2_w, padding=DILATION, dilation=DILATION), bn2), 0.0)
    out = bn(conv(out, conv3_w), bn3)
    return jnp.maximum(out + residual, 0.0)


if __name__ == "__main__":
    key = jax.random.PRNGKey(0)
    kx, kp = jax.random.split(key)
    N, H, W = 2, 16, 16
    x = jax.random.normal(kx, (N, INPLANES, H, W), jnp.float32)   # NCHW, like PyTorch

    kernel_params, torch_layout = make_params(kp, W)

    out = jax.block_until_ready(bottleneck_forward(x, kernel_params))

    ref = reference_forward(x, torch_layout)
    assert out.shape == (N, OUTPLANES, H, W)
    # bf16 matmul operands (f32 accumulation) vs f32 XLA reference -> loosened tolerance.
    assert jnp.allclose(out, ref, rtol=3e-2, atol=3e-2), float(jnp.max(jnp.abs(out - ref)))

    print("KERNEL_OK")
</pallas_src>

<mosaic_0001>
module attributes {stable_mosaic.version = 11 : i64} {
  func.func @bottleneck_kernel(%arg0: i32, %arg1: memref<32x256xf32, #tpu.memory_space<vmem>>, %arg2: memref<256x64xbf16, #tpu.memory_space<vmem>>, %arg3: memref<1x64xf32, #tpu.memory_space<vmem>>, %arg4: memref<192x64xbf16, #tpu.memory_space<vmem>>, %arg5: memref<1x64xf32, #tpu.memory_space<vmem>>, %arg6: memref<64x256xbf16, #tpu.memory_space<vmem>>, %arg7: memref<1x256xf32, #tpu.memory_space<vmem>>, %arg8: memref<32x256xf32, #tpu.memory_space<vmem>>) attributes {dimension_semantics = [#tpu.dimension_semantics<parallel>], iteration_bounds = array<i64: 1>, scalar_prefetch = 0 : i64, scratch_operands = 0 : i64, tpu.core_type = #tpu.core_type<tc>, window_params = [{transform_indices = @transform_0, window_bounds = array<i64: 32, 256>}, {pipeline_mode = #tpu.pipeline_mode<synchronous>, transform_indices = @transform_1, window_bounds = array<i64: 256, 64>}, {pipeline_mode = #tpu.pipeline_mode<synchronous>, transform_indices = @transform_2, window_bounds = array<i64: 1, 64>}, {pipeline_mode = #tpu.pipeline_mode<synchronous>, transform_indices = @transform_3, window_bounds = array<i64: 192, 64>}, {pipeline_mode = #tpu.pipeline_mode<synchronous>, transform_indices = @transform_4, window_bounds = array<i64: 1, 64>}, {pipeline_mode = #tpu.pipeline_mode<synchronous>, transform_indices = @transform_5, window_bounds = array<i64: 64, 256>}, {pipeline_mode = #tpu.pipeline_mode<synchronous>, transform_indices = @transform_6, window_bounds = array<i64: 1, 256>}, {transform_indices = @transform_7, window_bounds = array<i64: 32, 256>}]} {
    %c0 = arith.constant 0 : index
    %c0_0 = arith.constant 0 : index
    %0 = vector.load %arg1[%c0, %c0_0] : memref<32x256xf32, #tpu.memory_space<vmem>>, vector<32x256xf32>
    %1 = arith.truncf %0 : vector<32x256xf32> to vector<32x256xbf16>
    %c0_1 = arith.constant 0 : index
    %c0_2 = arith.constant 0 : index
    %2 = vector.load %arg2[%c0_1, %c0_2] : memref<256x64xbf16, #tpu.memory_space<vmem>>, vector<256x64xbf16>
    %cst = arith.constant dense<0.000000e+00> : vector<32x64xf32>
    %3 = tpu.matmul %1, %2, %cst {dimension_numbers = #tpu.dot_dimension_numbers<[1], [0], [0], [1], [0, 0, 1, 1], [], []>} : vector<32x256xbf16>, vector<256x64xbf16>, vector<32x64xf32> -> vector<32x64xf32>
    %c0_3 = arith.constant 0 : index
    %c0_4 = arith.constant 0 : index
    %4 = vector.load %arg3[%c0_3, %c0_4] : memref<1x64xf32, #tpu.memory_space<vmem>>, vector<1x64xf32>
    %5 = vector.broadcast %4 : vector<1x64xf32> to vector<32x64xf32>
    %6 = arith.addf %3, %5 : vector<32x64xf32>
    %cst_5 = arith.constant 0.000000e+00 : f32
    %7 = vector.broadcast %cst_5 : f32 to vector<32x64xf32>
    %8 = arith.maximumf %6, %7 : vector<32x64xf32>
    %9 = tpu.iota {dimensions = array<i32: 0>} : vector<32x64xi32>
    %c16_i32 = arith.constant 16 : i32
    %c0_i32 = arith.constant 0 : i32
    %10 = arith.cmpi eq, %c16_i32, %c0_i32 : i32
    %c1_i32 = arith.constant 1 : i32
    %11 = arith.select %10, %c1_i32, %c16_i32 : i32
    %12 = vector.broadcast %11 : i32 to vector<32x64xi32>
    %13 = arith.remsi %9, %12 : vector<32x64xi32>
    %c0_i32_6 = arith.constant 0 : i32
    %14 = vector.broadcast %c0_i32_6 : i32 to vector<32x64xi32>
    %15 = arith.cmpi ne, %13, %14 : vector<32x64xi32>
    %c0_i32_7 = arith.constant 0 : i32
    %16 = vector.broadcast %c0_i32_7 : i32 to vector<32x64xi32>
    %17 = arith.cmpi slt, %13, %16 : vector<32x64xi32>
    %c0_i32_8 = arith.constant 0 : i32
    %18 = arith.cmpi slt, %11, %c0_i32_8 : i32
    %19 = vector.broadcast %18 : i1 to vector<32x64xi1>
    %20 = vector.broadcast %19 : vector<32x64xi1> to vector<32x64xi1>
    %21 = arith.xori %17, %20 : vector<32x64xi1>
    %22 = arith.andi %21, %15 : vector<32x64xi1>
    %23 = vector.broadcast %11 : i32 to vector<32x64xi32>
    %24 = arith.addi %13, %23 : vector<32x64xi32>
    %25 = arith.select %22, %24, %13 : vector<32x64xi1>, vector<32x64xi32>
    %c1_i32_9 = arith.constant 1 : i32
    %26 = vector.broadcast %c1_i32_9 : i32 to vector<32x64xi32>
    %27 = arith.cmpi sge, %25, %26 : vector<32x64xi32>
    %c1_i32_10 = arith.constant 1 : i32
    %28 = tpu.dynamic_rotate %8 by %c1_i32_10 dim 0 : vector<32x64xf32>, i32 -> vector<32x64xf32>
    %cst_11 = arith.constant 0.000000e+00 : f32
    %29 = vector.broadcast %cst_11 : f32 to vector<32x64xf32>
    %30 = arith.select %27, %28, %29 : vector<32x64xi1>, vector<32x64xf32>
    %c14_i32 = arith.constant 14 : i32
    %31 = vector.broadcast %c14_i32 : i32 to vector<32x64xi32>
    %32 = arith.cmpi sle, %25, %31 : vector<32x64xi32>
    %c31_i32 = arith.constant 31 : i32
    %33 = tpu.dynamic_rotate %8 by %c31_i32 dim 0 : vector<32x64xf32>, i32 -> vector<32x64xf32>
    %cst_12 = arith.constant 0.000000e+00 : f32
    %34 = vector.broadcast %cst_12 : f32 to vector<32x64xf32>
    %35 = arith.select %32, %33, %34 : vector<32x64xi1>, vector<32x64xf32>
    %36 = tpu.concatenate %30, %8, %35 in 1 : vector<32x64xf32>, vector<32x64xf32>, vector<32x64xf32> -> vector<32x192xf32>
    %37 = arith.truncf %36 : vector<32x192xf32> to vector<32x192xbf16>
    %c0_13 = arith.constant 0 : index
    %c0_14 = arith.constant 0 : index
    %38 = vector.load %arg4[%c0_13, %c0_14] : memref<192x64xbf16, #tpu.memory_space<vmem>>, vector<192x64xbf16>
    %cst_15 = arith.constant dense<0.000000e+00> : vector<32x64xf32>
    %39 = tpu.matmul %37, %38, %cst_15 {dimension_numbers = #tpu.dot_dimension_numbers<[1], [0], [0], [1], [0, 0, 1, 1], [], []>} : vector<32x192xbf16>, vector<192x64xbf16>, vector<32x64xf32> -> vector<32x64xf32>
    %c0_16 = arith.constant 0 : index
    %c0_17 = arith.constant 0 : index
    %40 = vector.load %arg5[%c0_16, %c0_17] : memref<1x64xf32, #tpu.memory_space<vmem>>, vector<1x64xf32>
    %41 = vector.broadcast %40 : vector<1x64xf32> to vector<32x64xf32>
    %42 = arith.addf %39, %41 : vector<32x64xf32>
    %cst_18 = arith.constant 0.000000e+00 : f32
    %43 = vector.broadcast %cst_18 : f32 to vector<32x64xf32>
    %44 = arith.maximumf %42, %43 : vector<32x64xf32>
    %45 = arith.truncf %44 : vector<32x64xf32> to vector<32x64xbf16>
    %c0_19 = arith.constant 0 : index
    %c0_20 = arith.constant 0 : index
    %46 = vector.load %arg6[%c0_19, %c0_20] : memref<64x256xbf16, #tpu.memory_space<vmem>>, vector<64x256xbf16>
    %cst_21 = arith.constant dense<0.000000e+00> : vector<32x256xf32>
    %47 = tpu.matmul %45, %46, %cst_21 {dimension_numbers = #tpu.dot_dimension_numbers<[1], [0], [0], [1], [0, 0, 1, 1], [], []>} : vector<32x64xbf16>, vector<64x256xbf16>, vector<32x256xf32> -> vector<32x256xf32>
    %c0_22 = arith.constant 0 : index
    %c0_23 = arith.constant 0 : index
    %48 = vector.load %arg7[%c0_22, %c0_23] : memref<1x256xf32, #tpu.memory_space<vmem>>, vector<1x256xf32>
    %49 = vector.broadcast %48 : vector<1x256xf32> to vector<32x256xf32>
    %50 = arith.addf %47, %49 : vector<32x256xf32>
    %51 = arith.addf %50, %0 : vector<32x256xf32>
    %cst_24 = arith.constant 0.000000e+00 : f32
    %52 = vector.broadcast %cst_24 : f32 to vector<32x256xf32>
    %53 = arith.maximumf %51, %52 : vector<32x256xf32>
    %c0_25 = arith.constant 0 : index
    %c0_26 = arith.constant 0 : index
    %54 = vector.load %arg8[%c0_25, %c0_26] : memref<32x256xf32, #tpu.memory_space<vmem>>, vector<32x256xf32>
    tpu.vector_store %arg8[%c0_25, %c0_26], %53 {strides = array<i32>} : memref<32x256xf32, #tpu.memory_space<vmem>>, vector<32x256xf32>,
    return
  }
  func.func @transform_0(%arg0: i32) -> (i32, i32) {
    %c0_i32 = arith.constant 0 : i32
    %c0_i32_0 = arith.constant 0 : i32
    return %arg0, %c0_i32 : i32, i32
  }
  func.func @transform_1(%arg0: i32) -> (i32, i32) {
    %c0_i32 = arith.constant 0 : i32
    %c0_i32_0 = arith.constant 0 : i32
    %c0_i32_1 = arith.constant 0 : i32
    return %c0_i32, %c0_i32_0 : i32, i32
  }
  func.func @transform_2(%arg0: i32) -> (i32, i32) {
    %c0_i32 = arith.constant 0 : i32
    %c0_i32_0 = arith.constant 0 : i32
    %c0_i32_1 = arith.constant 0 : i32
    return %c0_i32, %c0_i32_0 : i32, i32
  }
  func.func @transform_3(%arg0: i32) -> (i32, i32) {
    %c0_i32 = arith.constant 0 : i32
    %c0_i32_0 = arith.constant 0 : i32
    %c0_i32_1 = arith.constant 0 : i32
    return %c0_i32, %c0_i32_0 : i32, i32
  }
  func.func @transform_4(%arg0: i32) -> (i32, i32) {
    %c0_i32 = arith.constant 0 : i32
    %c0_i32_0 = arith.constant 0 : i32
    %c0_i32_1 = arith.constant 0 : i32
    return %c0_i32, %c0_i32_0 : i32, i32
  }
  func.func @transform_5(%arg0: i32) -> (i32, i32) {
    %c0_i32 = arith.constant 0 : i32
    %c0_i32_0 = arith.constant 0 : i32
    %c0_i32_1 = arith.constant 0 : i32
    return %c0_i32, %c0_i32_0 : i32, i32
  }
  func.func @transform_6(%arg0: i32) -> (i32, i32) {
    %c0_i32 = arith.constant 0 : i32
    %c0_i32_0 = arith.constant 0 : i32
    %c0_i32_1 = arith.constant 0 : i32
    return %c0_i32, %c0_i32_0 : i32, i32
  }
  func.func @transform_7(%arg0: i32) -> (i32, i32) {
    %c0_i32 = arith.constant 0 : i32
    %c0_i32_0 = arith.constant 0 : i32
    return %arg0, %c0_i32 : i32, i32
  }
}

</mosaic_0001>

<llo_original>
// kernel: tpu_custom_call.1
$region0: #{tpu_custom_call.1}
  #allocation0 [shape = 'u32[]', space=smem, size = 0x4, offset = 0x4, fixed_abs, tag = 'smem constant byte address 0x4 - core index']
  #allocation1 [shape = 'u32[72,128]{1,0:T(1,128)}', space=vmem, size = 0x9000, scoped, tag = 'internal scratch']
  %s0 = inlined_call_operand.vmem [shape: f32[32,256], index: 0, kind: input, shape index: {}]
  %s1 = inlined_call_operand.vmem [shape: bf16[256,64], index: 1, kind: input, shape index: {}]
  %s2 = inlined_call_operand.vmem [shape: f32[1,64], index: 2, kind: input, shape index: {}]
  %s3 = inlined_call_operand.vmem [shape: bf16[192,64], index: 3, kind: input, shape index: {}]
  %s4 = inlined_call_operand.vmem [shape: f32[1,64], index: 4, kind: input, shape index: {}]
  %s5 = inlined_call_operand.vmem [shape: bf16[64,256], index: 5, kind: input, shape index: {}]
  %s6 = inlined_call_operand.vmem [shape: f32[1,256], index: 6, kind: input, shape index: {}]
  %s7 = inlined_call_operand.hbm [shape: f32[32,256], index: 7, kind: output, shape index: {}]
  %s8 = sld [smem:[#allocation0]]
  $region38: #{tpu_custom_call.1} parent=0
    _
  %s10 = ssub.s32 1, %s8
  %s11 = scalar_select 0, %s10, %s8
  $region1: #{tpu_custom_call.1} parent=0
    #allocation2 [shape = 'u8[32768]{0}', space=vmem, size = 0x8000, scoped, tag = 'output window, operand 0, single buffered']
    #allocation3 [shape = 's32[1]{0}', space=sflag, size = 0x4, scoped, tag = 'scoped memory for tpu_custom_call.1']
    %12 = vsyncpa [#allocation3], 0
    // Predicated region
    $region2: #{tpu_custom_call.1} parent=1 // pred_check
      _
    $region3: #{tpu_custom_call.1} parent=1 // pred_check_branch
      %14 = sbr.rel (0) target = $region5
    $region4: #{tpu_custom_call.1} parent=1 // pred_region
      _
    $region5: #{tpu_custom_call.1} parent=1 // pred_fallthru
      _
    // Predicated region
    $region6: #{tpu_custom_call.1} parent=1 // pred_check
      _
    $region7: #{tpu_custom_call.1} parent=1 // pred_check_branch
      %16 = sbr.rel (0) target = $region9
    $region8: #{tpu_custom_call.1} parent=1 // pred_region
      _
    $region9: #{tpu_custom_call.1} parent=1 // pred_fallthru
      _
    // Predicated region
    $region10: #{tpu_custom_call.1} parent=1 // pred_check
      _
    $region11: #{tpu_custom_call.1} parent=1 // pred_check_branch
      %18 = sbr.rel (0) target = $region13
    $region12: #{tpu_custom_call.1} parent=1 // pred_region
      _
    $region13: #{tpu_custom_call.1} parent=1 // pred_fallthru
      _
    // Predicated region
    $region14: #{tpu_custom_call.1} parent=1 // pred_check
      _
    $region15: #{tpu_custom_call.1} parent=1 // pred_check_branch
      %20 = sbr.rel (0) target = $region17
    $region16: #{tpu_custom_call.1} parent=1 // pred_region
      _
    $region17: #{tpu_custom_call.1} parent=1 // pred_fallthru
      _
    // Predicated region
    $region18: #{tpu_custom_call.1} parent=1 // pred_check
      _
    $region19: #{tpu_custom_call.1} parent=1 // pred_check_branch
      %22 = sbr.rel (0) target = $region21
    $region20: #{tpu_custom_call.1} parent=1 // pred_region
      _
    $region21: #{tpu_custom_call.1} parent=1 // pred_fallthru
      _
    // Predicated region
    $region22: #{tpu_custom_call.1} parent=1 // pred_check
      _
    $region23: #{tpu_custom_call.1} parent=1 // pred_check_branch
      %24 = sbr.rel (0) target = $region25
    $region24: #{tpu_custom_call.1} parent=1 // pred_region
      _
    $region25: #{tpu_custom_call.1} parent=1 // pred_fallthru
      _
    // Predicated region
    $region26: #{tpu_custom_call.1} parent=1 // pred_check
      _
    $region27: #{tpu_custom_call.1} parent=1 // pred_check_branch
      %26 = sbr.rel (0) target = $region29
    $region28: #{tpu_custom_call.1} parent=1 // pred_region
      _
    $region29: #{tpu_custom_call.1} parent=1 // pred_fallthru
      _
    %v28 = vld [vmem:[%s0] sm:$0xff]
    %v29 = vld [vmem:[%s0 + $0x8] sm:$0xff]
    %v30 = vld [vmem:[%s0 + $0x10] sm:$0xff]
    %v31 = vld [vmem:[%s0 + $0x18] sm:$0xff]
    %v32 = vld [vmem:[%s0 + $0x20] sm:$0xff]
    %v33 = vld [vmem:[%s0 + $0x28] sm:$0xff]
    %v34 = vld [vmem:[%s0 + $0x30] sm:$0xff]
    %v35 = vld [vmem:[%s0 + $0x38] sm:$0xff]
    %v36 = vpack.c.bf16 %v30, %v28
    %v37 = vpack.c.bf16 %v31, %v29
    %v38 = vpack.c.bf16 %v34, %v32
    %v39 = vpack.c.bf16 %v35, %v33
    %v40 = vld [vmem:[%s1] sm:$0xf]
    %v41 = vld [vmem:[%s1 + $0x4] sm:$0xf]
    %v42 = vld [vmem:[%s1 + $0x8] sm:$0xf]
    %v43 = vld [vmem:[%s1 + $0xc] sm:$0xf]
    %v44 = vld [vmem:[%s1 + $0x10] sm:$0xf]
    %v45 = vld [vmem:[%s1 + $0x14] sm:$0xf]
    %v46 = vld [vmem:[%s1 + $0x18] sm:$0xf]
    %v47 = vld [vmem:[%s1 + $0x1c] sm:$0xf]
    %v48 = vld [vmem:[%s1 + $0x20] sm:$0xf]
    %v49 = vld [vmem:[%s1 + $0x24] sm:$0xf]
    %v50 = vld [vmem:[%s1 + $0x28] sm:$0xf]
    %v51 = vld [vmem:[%s1 + $0x2c] sm:$0xf]
    %v52 = vld [vmem:[%s1 + $0x30] sm:$0xf]
    %v53 = vld [vmem:[%s1 + $0x34] sm:$0xf]
    %v54 = vld [vmem:[%s1 + $0x38] sm:$0xf]
    %v55 = vld [vmem:[%s1 + $0x3c] sm:$0xf]
    %v56 = vld [vmem:[%s1 + $0x40] sm:$0xf]
    %v57 = vld [vmem:[%s1 + $0x44] sm:$0xf]
    %v58 = vld [vmem:[%s1 + $0x48] sm:$0xf]
    %v59 = vld [vmem:[%s1 + $0x4c] sm:$0xf]
    %v60 = vld [vmem:[%s1 + $0x50] sm:$0xf]
    %v61 = vld [vmem:[%s1 + $0x54] sm:$0xf]
    %v62 = vld [vmem:[%s1 + $0x58] sm:$0xf]
    %v63 = vld [vmem:[%s1 + $0x5c] sm:$0xf]
    %v64 = vld [vmem:[%s1 + $0x60] sm:$0xf]
    %v65 = vld [vmem:[%s1 + $0x64] sm:$0xf]
    %v66 = vld [vmem:[%s1 + $0x68] sm:$0xf]
    %v67 = vld [vmem:[%s1 + $0x6c] sm:$0xf]
    %v68 = vld [vmem:[%s1 + $0x70] sm:$0xf]
    %v69 = vld [vmem:[%s1 + $0x74] sm:$0xf]
    %v70 = vld [vmem:[%s1 + $0x78] sm:$0xf]
    %v71 = vld [vmem:[%s1 + $0x7c] sm:$0xf]
    %v72 = vld [vmem:[%s2] sm:$0x1]
    %v74 = vperm.slane %v72, 0
    %v108 = vunpack.c.l.b16 %v40
    %v109 = vunpack.c.l.b16 %v41
    %v110 = vunpack.c.l.b16 %v42
    %v111 = vunpack.c.l.b16 %v43
    %v112 = vunpack.c.l.b16 %v44
    %v113 = vunpack.c.l.b16 %v45
    %v114 = vunpack.c.l.b16 %v46
    %v115 = vunpack.c.l.b16 %v47
    %v116 = vunpack.c.l.b16 %v48
    %v117 = vunpack.c.l.b16 %v49
    %v118 = vunpack.c.l.b16 %v50
    %v119 = vunpack.c.l.b16 %v51
    %v120 = vunpack.c.l.b16 %v52
    %v121 = vunpack.c.l.b16 %v53
    %v122 = vunpack.c.l.b16 %v54
    %v123 = vunpack.c.l.b16 %v55
    %v124 = vunpack.c.l.b16 %v56
    %v125 = vunpack.c.l.b16 %v57
    %v126 = vunpack.c.l.b16 %v58
    %v127 = vunpack.c.l.b16 %v59
    %v128 = vunpack.c.l.b16 %v60
    %v129 = vunpack.c.l.b16 %v61
    %v130 = vunpack.c.l.b16 %v62
    %v131 = vunpack.c.l.b16 %v63
    %v132 = vunpack.c.l.b16 %v64
    %v133 = vunpack.c.l.b16 %v65
    %v134 = vunpack.c.l.b16 %v66
    %v135 = vunpack.c.l.b16 %v67
    %v136 = vunpack.c.l.b16 %v68
    %v137 = vunpack.c.l.b16 %v69
    %v138 = vunpack.c.l.b16 %v70
    %v139 = vunpack.c.l.b16 %v71
    %v140 = vpack.c.b16 %v109, %v108
    %v141 = vpack.c.b16 %v111, %v110
    %v142 = vpack.c.b16 %v113, %v112
    %v143 = vpack.c.b16 %v115, %v114
    %v144 = vpack.c.b16 %v117, %v116
    %v145 = vpack.c.b16 %v119, %v118
    %v146 = vpack.c.b16 %v121, %v120
    %v147 = vpack.c.b16 %v123, %v122
    %v148 = vpack.c.b16 %v125, %v124
    %v149 = vpack.c.b16 %v127, %v126
    %v150 = vpack.c.b16 %v129, %v128
    %v151 = vpack.c.b16 %v131, %v130
    %v152 = vpack.c.b16 %v133, %v132
    %v153 = vpack.c.b16 %v135, %v134
    %v154 = vpack.c.b16 %v137, %v136
    %v155 = vpack.c.b16 %v139, %v138
    %172 = vmatpush.bf16.msra.mxu0 %v147
    %173 = vmatpush.bf16.msra.mxu0 %v146
    %174 = vmatpush.bf16.msra.mxu0 %v145
    %175 = vmatpush.bf16.msra.mxu0 %v144
    %176 = vmatpush.bf16.msra.mxu0 %v143
    %177 = vmatpush.bf16.msra.mxu0 %v142
    %178 = vmatpush.bf16.msra.mxu0 %v141
    %179 = vmatpush.bf16.msra.mxu0 %v140
    %180 = vmatmul.bf16.gmra.mxu0 %v36
    %v181 = vpop.f32.mrf.mxu0
    %v182 = vadd.f32 %v74, %v181
    %v183 = vpop.f32.mrf.mxu0
    %v184 = vadd.f32 %v74, %v183
    %185 = vmatmul.bf16.gmra.mxu0 %v38
    %v186 = vpop.f32.mrf.mxu0
    %v187 = vadd.f32 %v74, %v186
    %v188 = vpop.f32.mrf.mxu0
    %v189 = vadd.f32 %v74, %v188
    %190 = vdwg.mxu0
    %191 = vmatpush.bf16.msra.mxu0 %v155
    %192 = vmatpush.bf16.msra.mxu0 %v154
    %193 = vmatpush.bf16.msra.mxu0 %v153
    %194 = vmatpush.bf16.msra.mxu0 %v152
    %195 = vmatpush.bf16.msra.mxu0 %v151
    %196 = vmatpush.bf16.msra.mxu0 %v150
    %197 = vmatpush.bf16.msra.mxu0 %v149
    %198 = vmatpush.bf16.msra.mxu0 %v148
    %199 = vmatmul.bf16.gmra.mxu0 %v37
    %v200 = vpop.f32.mrf.mxu0
    %v201 = vadd.f32 %v182, %v200
    %v202 = vpop.f32.mrf.mxu0
    %v203 = vadd.f32 %v184, %v202
    %204 = vmatmul.bf16.gmra.mxu0 %v39
    %v205 = vpop.f32.mrf.mxu0
    %v206 = vadd.f32 %v187, %v205
    %v207 = vpop.f32.mrf.mxu0
    %v208 = vadd.f32 %v189, %v207
    %209 = vdwg.mxu0
    %v210 = vmax.f32 %v201, 0.0
    %v211 = vmax.f32 %v203, 0.0
    %v212 = vmax.f32 %v206, 0.0
    %v213 = vmax.f32 %v208, 0.0
    %v214 = vlaneseq
    %v215 = vshrl.u32 %v214, 7
    %v216 = vadd.s32 %v215, 8
    %v217 = vadd.s32 %v215, 16
    %v218 = vadd.s32 %v215, 24
    %vm219 = vcmp.lt.s32.totalorder %v215, 0
    %v220 = vsub.s32 0, %v215
    %v221 = vsel %vm219, %v220, %v215
    %v222 = vshrl.u32 %v221, 4
    %v223 = vand.u32 %v221, 15
    %v224 = vsub.s32 0, %v223
    %v225 = vsel %vm219, %v224, %v223
    %vm226 = vcmp.lt.s32.totalorder %v216, 0
    %v227 = vsub.s32 0, %v216
    %v228 = vsel %vm226, %v227, %v216
    %v229 = vshrl.u32 %v228, 4
    %v230 = vand.u32 %v228, 15
    %v231 = vsub.s32 0, %v230
    %v232 = vsel %vm226, %v231, %v230
    %vm233 = vcmp.lt.s32.totalorder %v217, 0
    %v234 = vsub.s32 0, %v217
    %v235 = vsel %vm233, %v234, %v217
    %v236 = vshrl.u32 %v235, 4
    %v237 = vand.u32 %v235, 15
    %v238 = vsub.s32 0, %v237
    %v239 = vsel %vm233, %v238, %v237
    %vm240 = vcmp.lt.s32.totalorder %v218, 0
    %v241 = vsub.s32 0, %v218
    %v242 = vsel %vm240, %v241, %v218
    %v243 = vshrl.u32 %v242, 4
    %v244 = vand.u32 %v242, 15
    %v245 = vsub.s32 0, %v244
    %v246 = vsel %vm240, %v245, %v244
    %vm247 = vcmp.ne.s32.totalorder %v225, 0
    %vm248 = vcmp.ne.s32.totalorder %v232, 0
    %vm249 = vcmp.ne.s32.totalorder %v239, 0
    %vm250 = vcmp.ne.s32.totalorder %v246, 0
    %vm251 = vcmp.lt.s32.totalorder %v225, 0
    %vm252 = vcmp.lt.s32.totalorder %v232, 0
    %vm253 = vcmp.lt.s32.totalorder %v239, 0
    %vm254 = vcmp.lt.s32.totalorder %v246, 0
    %vm255 = vmand %vm251, %vm247
    %vm256 = vmand %vm252, %vm248
    %vm257 = vmand %vm253, %vm249
    %vm258 = vmand %vm254, %vm250
    %v259 = vadd.s32 %v225, 16
    %v260 = vadd.s32 %v232, 16
    %v261 = vadd.s32 %v239, 16
    %v262 = vadd.s32 %v246, 16
    %v263 = vsel %vm255, %v259, %v225
    %v264 = vsel %vm256, %v260, %v232
    %v265 = vsel %vm257, %v261, %v239
    %v266 = vsel %vm258, %v262, %v246
    %vm267 = vcmp.ge.s32.totalorder %v263, 1
    %vm268 = vcmp.ge.s32.totalorder %v264, 1
    %vm269 = vcmp.ge.s32.totalorder %v265, 1
    %vm270 = vcmp.ge.s32.totalorder %v266, 1
    %v271 = vrot.slane %v210, 7
    %v272 = vrot.slane %v211, 7
    %v273 = vrot.slane %v212, 7
    %v274 = vrot.slane %v213, 7
    %vm275 = vcmp.lt.s32.totalorder %v215, 1
    %v276 = vsel %vm275, %v273, %v274
    %v277 = vsel %vm275, %v272, %v273
    %v278 = vsel %vm275, %v271, %v272
    %v279 = vsel %vm275, %v274, %v271
    %v280 = vsel %vm267, %v279, 0.0
    %v281 = vsel %vm268, %v278, 0.0
    %v282 = vsel %vm269, %v277, 0.0
    %v283 = vsel %vm270, %v276, 0.0
    %vm284 = vcmp.le.s32.totalorder %v263, 14
    %vm285 = vcmp.le.s32.totalorder %v264, 14
    %vm286 = vcmp.le.s32.totalorder %v265, 14
    %vm287 = vcmp.le.s32.totalorder %v266, 14
    %v288 = vrot.slane %v210, 1
    %v289 = vrot.slane %v211, 1
    %v290 = vrot.slane %v212, 1
    %v291 = vrot.slane %v213, 1
    %vm292 = vcmp.lt.s32.totalorder %v215, 7
    %v293 = vsel %vm292, %v290, %v291
    %v294 = vsel %vm292, %v289, %v290
    %v295 = vsel %vm292, %v288, %v289
    %v296 = vsel %vm292, %v291, %v288
    %v297 = vsel %vm284, %v295, 0.0
    %v298 = vsel %vm285, %v294, 0.0
    %v299 = vsel %vm286, %v293, 0.0
    %v300 = vsel %vm287, %v296, 0.0
    %305 = vrot.lane.b32.xlu0 %v210, 64
    %v306 = vpop.permute.xlu0 %305
    %307 = vrot.lane.b32.xlu0 %v211, 64
    %v308 = vpop.permute.xlu0 %307
    %309 = vrot.lane.b32.xlu0 %v212, 64
    %v310 = vpop.permute.xlu0 %309
    %311 = vrot.lane.b32.xlu0 %v213, 64
    %v312 = vpop.permute.xlu0 %311
    %vm317 = vcmask 523264
    %v318 = vsel %vm317, %v280, %v306
    %v319 = vsel %vm317, %v281, %v308
    %v320 = vsel %vm317, %v282, %v310
    %v321 = vsel %vm317, %v283, %v312
    %v322 = vpack.c.bf16 %v319, %v318
    %v323 = vpack.c.bf16 %v298, %v297
    %v324 = vpack.c.bf16 %v321, %v320
    %v325 = vpack.c.bf16 %v300, %v299
    %v326 = vld [vmem:[%s3] sm:$0xf]
    %v327 = vld [vmem:[%s3 + $0x4] sm:$0xf]
    %v328 = vld [vmem:[%s3 + $0x8] sm:$0xf]
    %v329 = vld [vmem:[%s3 + $0xc] sm:$0xf]
    %v330 = vld [vmem:[%s3 + $0x10] sm:$0xf]
    %v331 = vld [vmem:[%s3 + $0x14] sm:$0xf]
    %v332 = vld [vmem:[%s3 + $0x18] sm:$0xf]
    %v333 = vld [vmem:[%s3 + $0x1c] sm:$0xf]
    %v334 = vld [vmem:[%s3 + $0x20] sm:$0xf]
    %v335 = vld [vmem:[%s3 + $0x24] sm:$0xf]
    %v336 = vld [vmem:[%s3 + $0x28] sm:$0xf]
    %v337 = vld [vmem:[%s3 + $0x2c] sm:$0xf]
    %v338 = vld [vmem:[%s3 + $0x30] sm:$0xf]
    %v339 = vld [vmem:[%s3 + $0x34] sm:$0xf]
    %v340 = vld [vmem:[%s3 + $0x38] sm:$0xf]
    %v341 = vld [vmem:[%s3 + $0x3c] sm:$0xf]
    %v342 = vld [vmem:[%s3 + $0x40] sm:$0xf]
    %v343 = vld [vmem:[%s3 + $0x44] sm:$0xf]
    %v344 = vld [vmem:[%s3 + $0x48] sm:$0xf]
    %v345 = vld [vmem:[%s3 + $0x4c] sm:$0xf]
    %v346 = vld [vmem:[%s3 + $0x50] sm:$0xf]
    %v347 = vld [vmem:[%s3 + $0x54] sm:$0xf]
    %v348 = vld [vmem:[%s3 + $0x58] sm:$0xf]
    %v349 = vld [vmem:[%s3 + $0x5c] sm:$0xf]
    %v350 = vld [vmem:[%s4] sm:$0x1]
    %v352 = vperm.slane %v350, 0
    %v378 = vunpack.c.l.b16 %v326
    %v379 = vunpack.c.l.b16 %v327
    %v380 = vunpack.c.l.b16 %v328
    %v381 = vunpack.c.l.b16 %v329
    %v382 = vunpack.c.l.b16 %v330
    %v383 = vunpack.c.l.b16 %v331
    %v384 = vunpack.c.l.b16 %v332
    %v385 = vunpack.c.l.b16 %v333
    %v386 = vunpack.c.l.b16 %v334
    %v387 = vunpack.c.l.b16 %v335
    %v388 = vunpack.c.l.b16 %v336
    %v389 = vunpack.c.l.b16 %v337
    %v390 = vunpack.c.l.b16 %v338
    %v391 = vunpack.c.l.b16 %v339
    %v392 = vunpack.c.l.b16 %v340
    %v393 = vunpack.c.l.b16 %v341
    %v394 = vunpack.c.l.b16 %v342
    %v395 = vunpack.c.l.b16 %v343
    %v396 = vunpack.c.l.b16 %v344
    %v397 = vunpack.c.l.b16 %v345
    %v398 = vunpack.c.l.b16 %v346
    %v399 = vunpack.c.l.b16 %v347
    %v400 = vunpack.c.l.b16 %v348
    %v401 = vunpack.c.l.b16 %v349
    %v402 = vpack.c.b16 %v379, %v378
    %v403 = vpack.c.b16 %v381, %v380
    %v404 = vpack.c.b16 %v383, %v382
    %v405 = vpack.c.b16 %v385, %v384
    %v406 = vpack.c.b16 %v387, %v386
    %v407 = vpack.c.b16 %v389, %v388
    %v408 = vpack.c.b16 %v391, %v390
    %v409 = vpack.c.b16 %v393, %v392
    %v410 = vpack.c.b16 %v395, %v394
    %v411 = vpack.c.b16 %v397, %v396
    %v412 = vpack.c.b16 %v399, %v398
    %v413 = vpack.c.b16 %v401, %v400
    %v427 = vsel %vm317, %v323, 0
    %v430 = vsel %vm317, %v325, 0
    %432 = vmatpush.bf16.msra.mxu0 %v409
    %433 = vmatpush.bf16.msra.mxu0 %v408
    %434 = vmatpush.bf16.msra.mxu0 %v407
    %435 = vmatpush.bf16.msra.mxu0 %v406
    %436 = vmatpush.bf16.msra.mxu0 %v405
    %437 = vmatpush.bf16.msra.mxu0 %v404
    %438 = vmatpush.bf16.msra.mxu0 %v403
    %439 = vmatpush.bf16.msra.mxu0 %v402
    %440 = vmatmul.bf16.gmra.mxu0 %v322
    %v441 = vpop.f32.mrf.mxu0
    %v442 = vadd.f32 %v352, %v441
    %v443 = vpop.f32.mrf.mxu0
    %v444 = vadd.f32 %v352, %v443
    %445 = vmatmul.bf16.gmra.mxu0 %v324
    %v446 = vpop.f32.mrf.mxu0
    %v447 = vadd.f32 %v352, %v446
    %v448 = vpop.f32.mrf.mxu0
    %v449 = vadd.f32 %v352, %v448
    %450 = vdwg.mxu0
    %451 = vmatpush.bf16.msra.mxu0 0
    %452 = vmatpush.bf16.msra.mxu0 0
    %453 = vmatpush.bf16.msra.mxu0 0
    %454 = vmatpush.bf16.msra.mxu0 0
    %455 = vmatpush.bf16.msra.mxu0 %v413
    %456 = vmatpush.bf16.msra.mxu0 %v412
    %457 = vmatpush.bf16.msra.mxu0 %v411
    %458 = vmatpush.bf16.msra.mxu0 %v410
    %459 = vmatmul.bf16.gmra.mxu0 %v427
    %v460 = vpop.f32.mrf.mxu0
    %v461 = vadd.f32 %v442, %v460
    %v462 = vpop.f32.mrf.mxu0
    %v463 = vadd.f32 %v444, %v462
    %464 = vmatmul.bf16.gmra.mxu0 %v430
    %v465 = vpop.f32.mrf.mxu0
    %v466 = vadd.f32 %v447, %v465
    %v467 = vpop.f32.mrf.mxu0
    %v468 = vadd.f32 %v449, %v467
    %469 = vdwg.mxu0
    %v470 = vmax.f32 %v461, 0.0
    %v471 = vmax.f32 %v463, 0.0
    %v472 = vmax.f32 %v466, 0.0
    %v473 = vmax.f32 %v468, 0.0
    %v474 = vpack.c.bf16 %v471, %v470
    %v475 = vpack.c.bf16 %v473, %v472
    %v476 = vld [vmem:[%s5] sm:$0xff]
    %v477 = vld [vmem:[%s5 + $0x8] sm:$0xff]
    %v478 = vld [vmem:[%s5 + $0x10] sm:$0xff]
    %v479 = vld [vmem:[%s5 + $0x18] sm:$0xff]
    %v480 = vld [vmem:[%s5 + $0x20] sm:$0xff]
    %v481 = vld [vmem:[%s5 + $0x28] sm:$0xff]
    %v482 = vld [vmem:[%s5 + $0x30] sm:$0xff]
    %v483 = vld [vmem:[%s5 + $0x38] sm:$0xff]
    %v484 = vld [vmem:[%s6] sm:$0x3]
    %v486 = vperm.slane %v484, 0
    %v487 = vperm.slane %v484, 1
    %v498 = vunpack.c.l.b16 %v476
    %v499 = vunpack.c.h.b16 %v476
    %v500 = vunpack.c.l.b16 %v477
    %v501 = vunpack.c.h.b16 %v477
    %v502 = vunpack.c.l.b16 %v478
    %v503 = vunpack.c.h.b16 %v478
    %v504 = vunpack.c.l.b16 %v479
    %v505 = vunpack.c.h.b16 %v479
    %v506 = vunpack.c.l.b16 %v480
    %v507 = vunpack.c.h.b16 %v480
    %v508 = vunpack.c.l.b16 %v481
    %v509 = vunpack.c.h.b16 %v481
    %v510 = vunpack.c.l.b16 %v482
    %v511 = vunpack.c.h.b16 %v482
    %v512 = vunpack.c.l.b16 %v483
    %v513 = vunpack.c.h.b16 %v483
    %v514 = vpack.c.b16 %v500, %v498
    %v515 = vpack.c.b16 %v501, %v499
    %v516 = vpack.c.b16 %v504, %v502
    %v517 = vpack.c.b16 %v505, %v503
    %v518 = vpack.c.b16 %v508, %v506
    %v519 = vpack.c.b16 %v509, %v507
    %v520 = vpack.c.b16 %v512, %v510
    %v521 = vpack.c.b16 %v513, %v511
    %v531 = vsel %vm317, %v474, 0
    %v534 = vsel %vm317, %v475, 0
    %536 = vmatpush.bf16.msra.mxu0 0
    %537 = vmatpush.bf16.msra.mxu0 0
    %538 = vmatpush.bf16.msra.mxu0 0
    %539 = vmatpush.bf16.msra.mxu0 0
    %540 = vmatpush.bf16.msra.mxu0 %v520
    %541 = vmatpush.bf16.msra.mxu0 %v518
    %542 = vmatpush.bf16.msra.mxu0 %v516
    %543 = vmatpush.bf16.msra.mxu0 %v514
    %544 = vmatmul.bf16.gmra.mxu0 %v531
    %v545 = vpop.f32.mrf.mxu0
    %v546 = vadd.f32 %v486, %v545
    %v547 = vpop.f32.mrf.mxu0
    %v548 = vadd.f32 %v486, %v547
    %549 = vmatmul.bf16.gmra.mxu0 %v534
    %v550 = vpop.f32.mrf.mxu0
    %v551 = vadd.f32 %v486, %v550
    %v552 = vpop.f32.mrf.mxu0
    %v553 = vadd.f32 %v486, %v552
    %554 = vdwg.mxu0
    %555 = vmatpush.bf16.msra.mxu0 0
    %556 = vmatpush.bf16.msra.mxu0 0
    %557 = vmatpush.bf16.msra.mxu0 0
    %558 = vmatpush.bf16.msra.mxu0 0
    %559 = vmatpush.bf16.msra.mxu0 %v521
    %560 = vmatpush.bf16.msra.mxu0 %v519
    %561 = vmatpush.bf16.msra.mxu0 %v517
    %562 = vmatpush.bf16.msra.mxu0 %v515
    %563 = vmatmul.bf16.gmra.mxu0 %v531
    %v564 = vpop.f32.mrf.mxu0
    %v565 = vadd.f32 %v487, %v564
    %v566 = vpop.f32.mrf.mxu0
    %v567 = vadd.f32 %v487, %v566
    %568 = vmatmul.bf16.gmra.mxu0 %v534
    %v569 = vpop.f32.mrf.mxu0
    %v570 = vadd.f32 %v487, %v569
    %v571 = vpop.f32.mrf.mxu0
    %v572 = vadd.f32 %v487, %v571
    %573 = vdwg.mxu0
    %v574 = vadd.f32 %v546, %v28
    %v575 = vadd.f32 %v565, %v29
    %v576 = vadd.f32 %v548, %v30
    %v577 = vadd.f32 %v567, %v31
    %v578 = vadd.f32 %v551, %v32
    %v579 = vadd.f32 %v570, %v33
    %v580 = vadd.f32 %v553, %v34
    %v581 = vadd.f32 %v572, %v35
    %v582 = vmax.f32 %v574, 0.0
    %v583 = vmax.f32 %v575, 0.0
    %v584 = vmax.f32 %v576, 0.0
    %v585 = vmax.f32 %v577, 0.0
    %v586 = vmax.f32 %v578, 0.0
    %v587 = vmax.f32 %v579, 0.0
    %v588 = vmax.f32 %v580, 0.0
    %v589 = vmax.f32 %v581, 0.0
    %590 = vst [vmem:[#allocation2] sm:$0xff] %v582
    %591 = vst [vmem:[#allocation2 + $0x8] sm:$0xff] %v583
    %592 = vst [vmem:[#allocation2 + $0x10] sm:$0xff] %v584
    %593 = vst [vmem:[#allocation2 + $0x18] sm:$0xff] %v585
    %594 = vst [vmem:[#allocation2 + $0x20] sm:$0xff] %v586
    %595 = vst [vmem:[#allocation2 + $0x28] sm:$0xff] %v587
    %596 = vst [vmem:[#allocation2 + $0x30] sm:$0xff] %v588
    %597 = vst [vmem:[#allocation2 + $0x38] sm:$0xff] %v589
    // Predicated region
    $region30: #{tpu_custom_call.1} parent=1 // pred_check
      _
    $region31: #{tpu_custom_call.1} parent=1 // pred_check_branch
      %599 = sbr.rel (0) target = $region33
    $region32: #{tpu_custom_call.1} parent=1 // pred_region
      %601 = vsyncadd [#allocation3], 0
      %s602 = sshll.u32 [#allocation2], 4
      %s603 = int_to_ptr.vmem [resolvable:$true] %s602
      %s604 = sshll.u32 %s7, 4
      %s605 = int_to_ptr.hbm [resolvable:$true] %s604
      %610 = dma.vmem_to_hbm [thread:$0]  %s603, 1024, %s605, [#allocation3], 256, 256, 16
    $region33: #{tpu_custom_call.1} parent=1 // pred_fallthru
      _
    // Predicated region
    $region34: #{tpu_custom_call.1} parent=1 // pred_check
      _
    $region35: #{tpu_custom_call.1} parent=1 // pred_check_branch
      %612 = sbr.rel (0) target = $region37
    $region36: #{tpu_custom_call.1} parent=1 // pred_region
      %614 = dma.done [#allocation3], 1024
    $region37: #{tpu_custom_call.1} parent=1 // pred_fallthru
      _
    %615 = vsyncpa [#allocation3], 1

</llo_original>
